<compile_context>
chip_gen: v7x
topology: tpu7x:2x2x1
jax: 0.10.0
libtpu: 0.0.40
codegen_flags: <defaults>
</compile_context>

<pallas_src>
import jax
import jax.numpy as jnp
from jax.experimental import pallas as pl
from jax.experimental.pallas import tpu as pltpu

_LANES = 128
_SUBLANES = 8


def coxph_loss_kernel(risk_ref, cens_ref, out_ref):
    r = risk_ref[...].astype(jnp.float32)        # (R, 128), row-major event order
    c = cens_ref[...].astype(jnp.float32)        # (R, 128)
    rows = r.shape[0]

    # F.normalize(risk, p=2, dim=0): single-column risk -> global L2 norm.
    # Scalar reciprocal + multiply instead of an elementwise divide (EUP is
    # the saturating slot: exp + log are already two transcendental passes).
    norm = jnp.sqrt(jnp.sum(r * r))
    inv_norm = 1.0 / jnp.maximum(norm, 1e-12)
    riskmax = r * inv_norm

    e = jnp.exp(riskmax)                         # (R, 128)

    # Within-row inclusive prefix sum via a fixed 128x128 lower-triangular
    # matmul; the triangle is built in-kernel (tri[k, l] = 1.0 iff k <= l).
    it0 = jax.lax.broadcasted_iota(jnp.int32, (_LANES, _LANES), 0)
    it1 = jax.lax.broadcasted_iota(jnp.int32, (_LANES, _LANES), 1)
    tri_lane = (it0 <= it1).astype(jnp.float32)
    csum_lane = jnp.dot(e, tri_lane, preferred_element_type=jnp.float32)   # (R, 128)

    # Cross-row carry: exclusive prefix sum of the per-row totals with a
    # log2(R)-step roll/add scan (XLU) instead of an O(R^2) matmul + input.
    # Row totals are lane 127 of the MXU result (inclusive row sums).
    row_tot = jnp.broadcast_to(csum_lane[:, _LANES - 1:_LANES], (rows, _LANES))
    row_idx = jax.lax.broadcasted_iota(jnp.int32, (rows, _LANES), 0)
    x = row_tot
    d = 1
    while d < rows:                              # static, unrolled at trace time
        x = x + jnp.where(row_idx >= d, pltpu.roll(x, shift=d, axis=0), 0.0)
        d *= 2
    row_off = x - row_tot                        # inclusive -> exclusive scan
    csum = csum_lane + row_off                   # full flattened cumsum(exp(riskmax))

    # Fused epilogue: loss = -sum((riskmax - log(csum)) * c) / count_nonzero(c)
    # NOTE: like the PyTorch module, assumes >= 1 nonzero censor (else div-by-0).
    nnz = jnp.sum((c != 0.0).astype(jnp.float32))
    loss = -jnp.sum((riskmax - jnp.log(csum)) * c) / nnz
    out_ref[...] = jnp.broadcast_to(loss, (1, 1)).astype(out_ref.dtype)


def coxph_loss(risk, censors):
    """risk: (N, 1) or (N,) float; censors: (N,) or (N, 1) float with >=1 nonzero."""
    if risk.ndim not in (1, 2) or (risk.ndim == 2 and risk.shape[1] != 1):
        raise ValueError("coxph_loss expects risk of shape (N,) or (N, 1)")

    n = int(risk.shape[0])
    tile = _SUBLANES * _LANES                    # 1024: keeps (8,128) vregs dense
    n_pad = max(tile, ((n + tile - 1) // tile) * tile)
    rows = n_pad // _LANES

    r_flat = jnp.reshape(risk.astype(jnp.float32), (n,))
    c_flat = jnp.reshape(censors.astype(jnp.float32), (n,))
    r2d = jnp.pad(r_flat, (0, n_pad - n)).reshape(rows, _LANES)
    c2d = jnp.pad(c_flat, (0, n_pad - n)).reshape(rows, _LANES)

    # Single-block VMEM budget: 2 double-buffered f32 inputs + ~8 live (R,128)
    # f32 temporaries + headroom.  Explicit so v7x's 32 MiB default scoped
    # limit does not become a ceiling before v5e/v6e's.
    vmem_limit = int(min(max(12 * 4 * n_pad + (4 << 20), 32 << 20), 100 << 20))

    out = pl.pallas_call(
        coxph_loss_kernel,
        out_shape=jax.ShapeDtypeStruct((1, 1), jnp.float32),
        grid=(1,),
        in_specs=[
            pl.BlockSpec((rows, _LANES), lambda i: (0, 0)),
            pl.BlockSpec((rows, _LANES), lambda i: (0, 0)),
        ],
        out_specs=pl.BlockSpec((1, 1), lambda i: (0, 0)),
        compiler_params=pltpu.CompilerParams(
            dimension_semantics=("arbitrary",),
            vmem_limit_bytes=vmem_limit),
    )(r2d, c2d)
    return out[0, 0]


def coxph_loss_ref(risk, censors):
    """Pure-JAX reference mirroring the PyTorch forward."""
    r = risk.astype(jnp.float32).reshape(-1, 1)
    norm = jnp.sqrt(jnp.sum(r * r, axis=0, keepdims=True))
    riskmax = r / jnp.maximum(norm, 1e-12)
    log_risk = jnp.log(jnp.cumsum(jnp.exp(riskmax), axis=0))
    uncensored = riskmax - log_risk
    censored = uncensored * censors.astype(jnp.float32).reshape(-1, 1)
    nnz = jnp.sum(censors != 0).astype(jnp.float32)
    return -jnp.sum(censored) / nnz


if __name__ == "__main__":
    key = jax.random.PRNGKey(0)

    # Case 1: tiny batch, matching the module's typical usage.
    n1 = 8
    risk1 = jax.random.normal(key, (n1, 1), dtype=jnp.float32)
    cens1 = jnp.array([1.0, 0.0, 1.0, 1.0, 0.0, 1.0, 0.0, 1.0], dtype=jnp.float32)
    loss1 = coxph_loss(risk1, cens1)
    jax.block_until_ready(loss1)
    ref1 = coxph_loss_ref(risk1, cens1)
    assert jnp.allclose(loss1, ref1, atol=1e-5, rtol=1e-5), (loss1, ref1)

    # Case 2: spans several 128-lane rows so the roll-based cross-row carry
    # of the two-level prefix sum is exercised with real (non-padding) data.
    k1, k2 = jax.random.split(key)
    n2 = 300
    risk2 = jax.random.normal(k1, (n2, 1), dtype=jnp.float32)
    cens2 = (jax.random.uniform(k2, (n2,)) > 0.5).astype(jnp.float32)
    cens2 = cens2.at[0].set(1.0)   # guarantee >= 1 event
    loss2 = coxph_loss(risk2, cens2)
    jax.block_until_ready(loss2)
    ref2 = coxph_loss_ref(risk2, cens2)
    assert jnp.allclose(loss2, ref2, atol=1e-5, rtol=1e-5), (loss2, ref2)

    print("KERNEL_OK")
</pallas_src>

<mosaic_0001>
module attributes {stable_mosaic.version = 11 : i64} {
  func.func @coxph_loss_kernel(%arg0: i32, %arg1: memref<8x128xf32, #tpu.memory_space<vmem>>, %arg2: memref<8x128xf32, #tpu.memory_space<vmem>>, %arg3: memref<1x1xf32, #tpu.memory_space<vmem>>) attributes {dimension_semantics = [#tpu.dimension_semantics<arbitrary>], iteration_bounds = array<i64: 1>, scalar_prefetch = 0 : i64, scratch_operands = 0 : i64, tpu.core_type = #tpu.core_type<tc>, window_params = [{pipeline_mode = #tpu.pipeline_mode<synchronous>, transform_indices = @transform_0, window_bounds = array<i64: 8, 128>}, {pipeline_mode = #tpu.pipeline_mode<synchronous>, transform_indices = @transform_1, window_bounds = array<i64: 8, 128>}, {pipeline_mode = #tpu.pipeline_mode<synchronous>, transform_indices = @transform_2, window_bounds = array<i64: 1, 1>}]} {
    %c0 = arith.constant 0 : index
    %c0_0 = arith.constant 0 : index
    %0 = vector.load %arg1[%c0, %c0_0] : memref<8x128xf32, #tpu.memory_space<vmem>>, vector<8x128xf32>
    %c0_1 = arith.constant 0 : index
    %c0_2 = arith.constant 0 : index
    %1 = vector.load %arg2[%c0_1, %c0_2] : memref<8x128xf32, #tpu.memory_space<vmem>>, vector<8x128xf32>
    %2 = arith.mulf %0, %0 : vector<8x128xf32>
    %3 = vector.shape_cast %2 : vector<8x128xf32> to vector<1x8x128xf32>
    %cst = arith.constant dense<0.000000e+00> : vector<1xf32>
    %4 = vector.multi_reduction <add>, %3, %cst [1, 2] : vector<1x8x128xf32> to vector<1xf32>
    %5 = vector.shape_cast %4 : vector<1xf32> to vector<1x1x1xf32>
    %6 = vector.extract %5[0, 0, 0] : f32 from vector<1x1x1xf32>
    %7 = math.sqrt %6 : f32
    %cst_3 = arith.constant 9.99999996E-13 : f32
    %8 = arith.maximumf %7, %cst_3 : f32
    %cst_4 = arith.constant 1.000000e+00 : f32
    %9 = arith.divf %cst_4, %8 : f32
    %10 = vector.broadcast %9 : f32 to vector<8x128xf32>
    %11 = arith.mulf %0, %10 : vector<8x128xf32>
    %12 = math.exp %11 : vector<8x128xf32>
    %13 = tpu.iota {dimensions = array<i32: 0>} : vector<128x128xi32>
    %14 = tpu.iota {dimensions = array<i32: 1>} : vector<128x128xi32>
    %15 = arith.cmpi sle, %13, %14 : vector<128x128xi32>
    %16 = arith.extui %15 : vector<128x128xi1> to vector<128x128xi32>
    %17 = arith.sitofp %16 : vector<128x128xi32> to vector<128x128xf32>
    %cst_5 = arith.constant dense<0.000000e+00> : vector<8x128xf32>
    %18 = tpu.matmul %12, %17, %cst_5 {dimension_numbers = #tpu.dot_dimension_numbers<[1], [0], [0], [1], [0, 0, 1, 1], [], []>} : vector<8x128xf32>, vector<128x128xf32>, vector<8x128xf32> -> vector<8x128xf32>
    %19 = vector.extract_strided_slice %18 {offsets = [0, 127], sizes = [8, 1], strides = [1, 1]} : vector<8x128xf32> to vector<8x1xf32>
    %20 = vector.shape_cast %19 : vector<8x1xf32> to vector<8x1xf32>
    %21 = vector.broadcast %20 : vector<8x1xf32> to vector<8x128xf32>
    %22 = tpu.iota {dimensions = array<i32: 0>} : vector<8x128xi32>
    %c1_i32 = arith.constant 1 : i32
    %23 = vector.broadcast %c1_i32 : i32 to vector<8x128xi32>
    %24 = arith.cmpi sge, %22, %23 : vector<8x128xi32>
    %c1_i32_6 = arith.constant 1 : i32
    %25 = tpu.dynamic_rotate %21 by %c1_i32_6 dim 0 : vector<8x128xf32>, i32 -> vector<8x128xf32>
    %cst_7 = arith.constant 0.000000e+00 : f32
    %26 = vector.broadcast %cst_7 : f32 to vector<8x128xf32>
    %27 = arith.select %24, %25, %26 : vector<8x128xi1>, vector<8x128xf32>
    %28 = arith.addf %21, %27 : vector<8x128xf32>
    %c2_i32 = arith.constant 2 : i32
    %29 = vector.broadcast %c2_i32 : i32 to vector<8x128xi32>
    %30 = arith.cmpi sge, %22, %29 : vector<8x128xi32>
    %c2_i32_8 = arith.constant 2 : i32
    %31 = tpu.dynamic_rotate %28 by %c2_i32_8 dim 0 : vector<8x128xf32>, i32 -> vector<8x128xf32>
    %cst_9 = arith.constant 0.000000e+00 : f32
    %32 = vector.broadcast %cst_9 : f32 to vector<8x128xf32>
    %33 = arith.select %30, %31, %32 : vector<8x128xi1>, vector<8x128xf32>
    %34 = arith.addf %28, %33 : vector<8x128xf32>
    %c4_i32 = arith.constant 4 : i32
    %35 = vector.broadcast %c4_i32 : i32 to vector<8x128xi32>
    %36 = arith.cmpi sge, %22, %35 : vector<8x128xi32>
    %c4_i32_10 = arith.constant 4 : i32
    %37 = tpu.dynamic_rotate %34 by %c4_i32_10 dim 0 : vector<8x128xf32>, i32 -> vector<8x128xf32>
    %cst_11 = arith.constant 0.000000e+00 : f32
    %38 = vector.broadcast %cst_11 : f32 to vector<8x128xf32>
    %39 = arith.select %36, %37, %38 : vector<8x128xi1>, vector<8x128xf32>
    %40 = arith.addf %34, %39 : vector<8x128xf32>
    %41 = arith.subf %40, %21 : vector<8x128xf32>
    %42 = arith.addf %18, %41 : vector<8x128xf32>
    %cst_12 = arith.constant 0.000000e+00 : f32
    %43 = vector.broadcast %cst_12 : f32 to vector<8x128xf32>
    %44 = arith.cmpf one, %1, %43 : vector<8x128xf32>
    %45 = arith.extui %44 : vector<8x128xi1> to vector<8x128xi32>
    %46 = arith.sitofp %45 : vector<8x128xi32> to vector<8x128xf32>
    %47 = vector.shape_cast %46 : vector<8x128xf32> to vector<1x8x128xf32>
    %cst_13 = arith.constant dense<0.000000e+00> : vector<1xf32>
    %48 = vector.multi_reduction <add>, %47, %cst_13 [1, 2] : vector<1x8x128xf32> to vector<1xf32>
    %49 = vector.shape_cast %48 : vector<1xf32> to vector<1x1x1xf32>
    %50 = vector.extract %49[0, 0, 0] : f32 from vector<1x1x1xf32>
    %51 = math.log %42 : vector<8x128xf32>
    %52 = arith.subf %11, %51 : vector<8x128xf32>
    %53 = arith.mulf %52, %1 : vector<8x128xf32>
    %54 = vector.shape_cast %53 : vector<8x128xf32> to vector<1x8x128xf32>
    %cst_14 = arith.constant dense<0.000000e+00> : vector<1xf32>
    %55 = vector.multi_reduction <add>, %54, %cst_14 [1, 2] : vector<1x8x128xf32> to vector<1xf32>
    %56 = vector.shape_cast %55 : vector<1xf32> to vector<1x1x1xf32>
    %57 = vector.extract %56[0, 0, 0] : f32 from vector<1x1x1xf32>
    %cst_15 = arith.constant 0.000000e+00 : f32
    %58 = arith.subf %cst_15, %57 : f32
    %59 = arith.divf %58, %50 : f32
    %60 = vector.broadcast %59 : f32 to vector<1x1xf32>
    %c0_16 = arith.constant 0 : index
    %c0_17 = arith.constant 0 : index
    %61 = vector.load %arg3[%c0_16, %c0_17] : memref<1x1xf32, #tpu.memory_space<vmem>>, vector<1x1xf32>
    tpu.vector_store %arg3[%c0_16, %c0_17], %60 {strides = array<i32>} : memref<1x1xf32, #tpu.memory_space<vmem>>, vector<1x1xf32>,
    return
  }
  func.func @transform_0(%arg0: i32) -> (i32, i32) {
    %c0_i32 = arith.constant 0 : i32
    %c0_i32_0 = arith.constant 0 : i32
    %c0_i32_1 = arith.constant 0 : i32
    return %c0_i32, %c0_i32_0 : i32, i32
  }
  func.func @transform_1(%arg0: i32) -> (i32, i32) {
    %c0_i32 = arith.constant 0 : i32
    %c0_i32_0 = arith.constant 0 : i32
    %c0_i32_1 = arith.constant 0 : i32
    return %c0_i32, %c0_i32_0 : i32, i32
  }
  func.func @transform_2(%arg0: i32) -> (i32, i32) {
    %c0_i32 = arith.constant 0 : i32
    %c0_i32_0 = arith.constant 0 : i32
    %c0_i32_1 = arith.constant 0 : i32
    return %c0_i32, %c0_i32_0 : i32, i32
  }
}

</mosaic_0001>

<llo_original>
// kernel: tpu_custom_call.1
$region0: #{tpu_custom_call.1}
  #allocation0 [shape = 'u32[]', space=smem, size = 0x4, offset = 0x4, fixed_abs, tag = 'smem constant byte address 0x4 - core index']
  #allocation1 [shape = 'u32[144,128]{1,0:T(1,128)}', space=vmem, size = 0x12000, scoped, tag = 'internal scratch']
  %s0 = inlined_call_operand.hbm [shape: f32[8,128], index: 0, kind: input, shape index: {}]
  %s1 = inlined_call_operand.hbm [shape: f32[8,128], index: 1, kind: input, shape index: {}]
  %s2 = inlined_call_operand.hbm [shape: f32[1,1], index: 2, kind: output, shape index: {}]
  %s3 = sld [smem:[#allocation0]]
  $region26: #{tpu_custom_call.1} parent=0
    _
  %s5 = ssub.s32 1, %s3
  %s6 = scalar_select 0, %s5, %s3
  $region1: #{tpu_custom_call.1} parent=0
    #allocation2 [shape = 'u8[4096]{0}', space=vmem, size = 0x1000, scoped, tag = 'input window, operand 0, single buffered']
    #allocation3 [shape = 's32[1]{0}', space=sflag, size = 0x4, scoped, tag = 'scoped memory for tpu_custom_call.1']
    #allocation4 [shape = 's32[1]{0}', space=sflag, size = 0x4, scoped, tag = 'scoped memory for tpu_custom_call.1']
    #allocation5 [shape = 'u8[4096]{0}', space=vmem, size = 0x1000, scoped, tag = 'input window, operand 1, single buffered']
    #allocation6 [shape = 's32[1]{0}', space=sflag, size = 0x4, scoped, tag = 'scoped memory for tpu_custom_call.1']
    #allocation7 [shape = 'u8[512]{0}', space=vmem, size = 0x400, scoped, tag = 'output window, operand 0, single buffered']
    %7 = vsyncpa [#allocation3], 0
    %8 = vsyncpa [#allocation6], 0
    %9 = vsyncpa [#allocation4], 0
    // Predicated region
    $region2: #{tpu_custom_call.1} parent=1 // pred_check
      _
    $region3: #{tpu_custom_call.1} parent=1 // pred_check_branch
      %11 = sbr.rel (0) target = $region5
    $region4: #{tpu_custom_call.1} parent=1 // pred_region
      %s13 = ssub.s32 128, 128
      %14 = vsyncadd [#allocation3], %s13
      %s16 = sshll.u32 [#allocation2], 4
      %s17 = int_to_ptr.vmem [resolvable:$true] %s16
      %19 = dma.hbm_to_vmem [thread:$0]  %s0, 128, %s17, [#allocation3]
    $region5: #{tpu_custom_call.1} parent=1 // pred_fallthru
      _
    // Predicated region
    $region6: #{tpu_custom_call.1} parent=1 // pred_check
      _
    $region7: #{tpu_custom_call.1} parent=1 // pred_check_branch
      %21 = sbr.rel (0) target = $region9
    $region8: #{tpu_custom_call.1} parent=1 // pred_region
      %s23 = ssub.s32 128, 128
      %24 = vsyncadd [#allocation6], %s23
      %s26 = sshll.u32 [#allocation5], 4
      %s27 = int_to_ptr.vmem [resolvable:$true] %s26
      %29 = dma.hbm_to_vmem [thread:$0]  %s1, 128, %s27, [#allocation6]
    $region9: #{tpu_custom_call.1} parent=1 // pred_fallthru
      _
    // Predicated region
    $region10: #{tpu_custom_call.1} parent=1 // pred_check
      _
    $region11: #{tpu_custom_call.1} parent=1 // pred_check_branch
      %31 = sbr.rel (0) target = $region13
    $region12: #{tpu_custom_call.1} parent=1 // pred_region
      %32 = dma.done [#allocation3], 128
    $region13: #{tpu_custom_call.1} parent=1 // pred_fallthru
      _
    // Predicated region
    $region14: #{tpu_custom_call.1} parent=1 // pred_check
      _
    $region15: #{tpu_custom_call.1} parent=1 // pred_check_branch
      %34 = sbr.rel (0) target = $region17
    $region16: #{tpu_custom_call.1} parent=1 // pred_region
      %35 = dma.done [#allocation6], 128
    $region17: #{tpu_custom_call.1} parent=1 // pred_fallthru
      _
    %v36 = vld [vmem:[#allocation2] sm:$0xff]
    %v37 = vld [vmem:[#allocation5] sm:$0xff]
    %v38 = vmul.f32 %v36, %v36
    %39 = vadd.xlane.f32.xlu0 %v38
    %v40 = vpop.xlane.xlu0 %39
    %v41 = vrot.slane %v40, 4
    %v42 = vadd.f32 %v40, %v41
    %v43 = vrot.slane %v42, 2
    %v44 = vadd.f32 %v42, %v43
    %v45 = vrot.slane %v44, 1
    %v46 = vadd.f32 %v44, %v45
    %s47 = vtos %v46
    %v48 = vstv %s47
    %v49 = vrsqrt.pop %v48
    %v50 = vmul.f32 %v48, %v49
    %vm51 = vcmp.eq.f32.partialorder %v48, inf
    %v52 = vsel %vm51, %v48, %v50
    %vm53 = vcmp.eq.f32.partialorder %v48, 0.0
    %v54 = vand.u32 %v48, 2147483648
    %v55 = vsel %vm53, %v54, %v52
    %s56 = vtos %v55
    %s57 = smax.f32 %s56, 1e-12
    %v58 = vstv %s57
    %v59 = vrcp.pop %v58
    %s60 = vtos %v59
    %v61 = vstv %s60
    %v62 = vmul.f32 %v36, %v61
    %v63 = vmul.f32 %v62, 1.442695
    %v64 = vpow.pop %v63
    %v65 = vlaneseq
    %v66 = vshrl.u32 %v65, 7
    %v67 = vadd.s32 %v66, 8
    %v68 = vadd.s32 %v66, 16
    %v69 = vadd.s32 %v66, 24
    %v70 = vadd.s32 %v66, 32
    %v71 = vadd.s32 %v66, 40
    %v72 = vadd.s32 %v66, 48
    %v73 = vadd.s32 %v66, 56
    %v74 = vadd.s32 %v66, 64
    %v75 = vadd.s32 %v66, 72
    %v76 = vadd.s32 %v66, 80
    %v77 = vadd.s32 %v66, 88
    %v78 = vadd.s32 %v66, 96
    %v79 = vadd.s32 %v66, 104
    %v80 = vadd.s32 %v66, 112
    %v81 = vadd.s32 %v66, 120
    %v82 = vlaneseq
    %v83 = vand.u32 %v82, 127
    %vm84 = vcmp.le.s32.totalorder %v66, %v83
    %vm85 = vcmp.le.s32.totalorder %v67, %v83
    %vm86 = vcmp.le.s32.totalorder %v68, %v83
    %vm87 = vcmp.le.s32.totalorder %v69, %v83
    %vm88 = vcmp.le.s32.totalorder %v70, %v83
    %vm89 = vcmp.le.s32.totalorder %v71, %v83
    %vm90 = vcmp.le.s32.totalorder %v72, %v83
    %vm91 = vcmp.le.s32.totalorder %v73, %v83
    %vm92 = vcmp.le.s32.totalorder %v74, %v83
    %vm93 = vcmp.le.s32.totalorder %v75, %v83
    %vm94 = vcmp.le.s32.totalorder %v76, %v83
    %vm95 = vcmp.le.s32.totalorder %v77, %v83
    %vm96 = vcmp.le.s32.totalorder %v78, %v83
    %vm97 = vcmp.le.s32.totalorder %v79, %v83
    %vm98 = vcmp.le.s32.totalorder %v80, %v83
    %vm99 = vcmp.le.s32.totalorder %v81, %v83
    %v100 = vsel %vm84, 1, 0
    %v101 = vsel %vm85, 1, 0
    %v102 = vsel %vm86, 1, 0
    %v103 = vsel %vm87, 1, 0
    %v104 = vsel %vm88, 1, 0
    %v105 = vsel %vm89, 1, 0
    %v106 = vsel %vm90, 1, 0
    %v107 = vsel %vm91, 1, 0
    %v108 = vsel %vm92, 1, 0
    %v109 = vsel %vm93, 1, 0
    %v110 = vsel %vm94, 1, 0
    %v111 = vsel %vm95, 1, 0
    %v112 = vsel %vm96, 1, 0
    %v113 = vsel %vm97, 1, 0
    %v114 = vsel %vm98, 1, 0
    %v115 = vsel %vm99, 1, 0
    %v116 = vcvt.s32.f32 %v100
    %v117 = vcvt.s32.f32 %v101
    %v118 = vcvt.s32.f32 %v102
    %v119 = vcvt.s32.f32 %v103
    %v120 = vcvt.s32.f32 %v104
    %v121 = vcvt.s32.f32 %v105
    %v122 = vcvt.s32.f32 %v106
    %v123 = vcvt.s32.f32 %v107
    %v124 = vcvt.s32.f32 %v108
    %v125 = vcvt.s32.f32 %v109
    %v126 = vcvt.s32.f32 %v110
    %v127 = vcvt.s32.f32 %v111
    %v128 = vcvt.s32.f32 %v112
    %v129 = vcvt.s32.f32 %v113
    %v130 = vcvt.s32.f32 %v114
    %v131 = vcvt.s32.f32 %v115
    %132 = vmatprep.subr.mxu0 0.0
    %133 = vmatpush1.msra.mxu0 %v116
    %134 = vmatprep.subr.mxu0 0.0
    %135 = vmatpush1.msra.mxu0 %v117
    %136 = vmatprep.subr.mxu0 0.0
    %137 = vmatpush1.msra.mxu0 %v118
    %138 = vmatprep.subr.mxu0 0.0
    %139 = vmatpush1.msra.mxu0 %v119
    %140 = vmatprep.subr.mxu0 0.0
    %141 = vmatpush1.msra.mxu0 %v120
    %142 = vmatprep.subr.mxu0 0.0
    %143 = vmatpush1.msra.mxu0 %v121
    %144 = vmatprep.subr.mxu0 0.0
    %145 = vmatpush1.msra.mxu0 %v122
    %146 = vmatprep.subr.mxu0 0.0
    %147 = vmatpush1.msra.mxu0 %v123
    %148 = vmatprep.subr.mxu0 0.0
    %149 = vmatpush1.msra.mxu0 %v124
    %150 = vmatprep.subr.mxu0 0.0
    %151 = vmatpush1.msra.mxu0 %v125
    %152 = vmatprep.subr.mxu0 0.0
    %153 = vmatpush1.msra.mxu0 %v126
    %154 = vmatprep.subr.mxu0 0.0
    %155 = vmatpush1.msra.mxu0 %v127
    %156 = vmatprep.subr.mxu0 0.0
    %157 = vmatpush1.msra.mxu0 %v128
    %158 = vmatprep.subr.mxu0 0.0
    %159 = vmatpush1.msra.mxu0 %v129
    %160 = vmatprep.subr.mxu0 0.0
    %161 = vmatpush1.msra.mxu0 %v130
    %162 = vmatprep.subr.mxu0 0.0
    %163 = vmatpush1.msra.mxu0 %v131
    %164 = vmatprep.subr.mxu0 0.0
    %165 = vmatpush1.msra.mxu0 0.0
    %166 = vmatprep.subr.mxu0 0.0
    %167 = vmatpush1.msra.mxu0 0.0
    %168 = vmatprep.subr.mxu0 0.0
    %169 = vmatpush1.msra.mxu0 0.0
    %170 = vmatprep.subr.mxu0 0.0
    %171 = vmatpush1.msra.mxu0 0.0
    %172 = vmatprep.subr.mxu0 0.0
    %173 = vmatpush1.msra.mxu0 0.0
    %174 = vmatprep.subr.mxu0 0.0
    %175 = vmatpush1.msra.mxu0 0.0
    %176 = vmatprep.subr.mxu0 0.0
    %177 = vmatpush1.msra.mxu0 0.0
    %178 = vmatprep.subr.mxu0 0.0
    %179 = vmatpush1.msra.mxu0 0.0
    %180 = vmatprep.subr.mxu0 0.0
    %181 = vmatpush1.msra.mxu0 0.0
    %182 = vmatprep.subr.mxu0 0.0
    %183 = vmatpush1.msra.mxu0 0.0
    %184 = vmatprep.subr.mxu0 0.0
    %185 = vmatpush1.msra.mxu0 0.0
    %186 = vmatprep.subr.mxu0 0.0
    %187 = vmatpush1.msra.mxu0 0.0
    %188 = vmatprep.subr.mxu0 0.0
    %189 = vmatpush1.msra.mxu0 0.0
    %190 = vmatprep.subr.mxu0 0.0
    %191 = vmatpush1.msra.mxu0 0.0
    %192 = vmatprep.subr.mxu0 0.0
    %193 = vmatpush1.msra.mxu0 0.0
    %194 = vmatprep.subr.mxu0 0.0
    %195 = vmatpush1.msra.mxu0 0.0
    %196 = vmatprep.mubr.f32.mxu0 0.0
    %197 = vmatmul.mubr.f32.gmra.mrb[0].mxu0 %v64
    %v198 = vpop.f32.mrb[0].mxu0
    %v199 = vadd.f32 0.0, %v198
    %v200 = vpop.f32.mrb[0].mxu0
    %201 = vdwg.mxu0
    %203 = vset.pattern.permute.xlu0 127
    %204 = vperm.xlu0 %203, %v199
    %v205 = vpop.permute.xlu0 %204
    %vm207 = vcmp.ge.s32.totalorder %v66, 1
    %v208 = vrot.slane %v205, 7
    %v209 = vsel %vm207, %v208, 0.0
    %v210 = vadd.f32 %v205, %v209
    %vm211 = vcmp.ge.s32.totalorder %v66, 2
    %v212 = vrot.slane %v210, 6
    %v213 = vsel %vm211, %v212, 0.0
    %v214 = vadd.f32 %v210, %v213
    %vm215 = vcmp.ge.s32.totalorder %v66, 4
    %v216 = vrot.slane %v214, 4
    %v217 = vsel %vm215, %v216, 0.0
    %v218 = vadd.f32 %v214, %v217
    %v219 = vsub.f32 %v218, %v205
    %v220 = vadd.f32 %v199, %v219
    %vm221 = vcmp.ne.f32.partialorder %v37, 0.0
    %v222 = vsel %vm221, 1, 0
    %v223 = vcvt.s32.f32 %v222
    %224 = vadd.xlane.f32.xlu0 %v223
    %v225 = vpop.xlane.xlu0 %224
    %v226 = vrot.slane %v225, 4
    %v227 = vadd.f32 %v225, %v226
    %v228 = vrot.slane %v227, 2
    %v229 = vadd.f32 %v227, %v228
    %v230 = vrot.slane %v229, 1
    %v231 = vadd.f32 %v229, %v230
    %s232 = vtos %v231
    %v233 = vlog2.pop %v220
    %v234 = vmul.f32 %v233, 0.6931472
    %v235 = vsub.f32 %v62, %v234
    %v236 = vmul.f32 %v235, %v37
    %237 = vadd.xlane.f32.xlu0 %v236
    %v238 = vpop.xlane.xlu0 %237
    %v239 = vrot.slane %v238, 4
    %v240 = vadd.f32 %v238, %v239
    %v241 = vrot.slane %v240, 2
    %v242 = vadd.f32 %v240, %v241
    %v243 = vrot.slane %v242, 1
    %v244 = vadd.f32 %v242, %v243
    %s245 = vtos %v244
    %s246 = ssub.f32 0.0, %s245
    %v247 = vstv %s232
    %v248 = vrcp.pop %v247
    %s249 = vtos %v248
    %s250 = smul.f32 %s246, %s249
    %v251 = vstv %s250
    %vm252 = vcmask 0
    %253 = vst.msk [vmem:[#allocation7] sm:$0x1] %vm252, %v251
    // Predicated region
    $region18: #{tpu_custom_call.1} parent=1 // pred_check
      _
    $region19: #{tpu_custom_call.1} parent=1 // pred_check_branch
      %255 = sbr.rel (0) target = $region21
    $region20: #{tpu_custom_call.1} parent=1 // pred_region
      %s257 = ssub.s32 16, 16
      %258 = vsyncadd [#allocation4], %s257
      %s260 = sshll.u32 [#allocation7], 4
      %s261 = int_to_ptr.vmem [resolvable:$true] %s260
      %263 = dma.vmem_to_hbm [thread:$0]  %s261, 16, %s2, [#allocation4]
    $region21: #{tpu_custom_call.1} parent=1 // pred_fallthru
      _
    // Predicated region
    $region22: #{tpu_custom_call.1} parent=1 // pred_check
      _
    $region23: #{tpu_custom_call.1} parent=1 // pred_check_branch
      %265 = sbr.rel (0) target = $region25
    $region24: #{tpu_custom_call.1} parent=1 // pred_region
      %266 = dma.done [#allocation4], 16
    $region25: #{tpu_custom_call.1} parent=1 // pred_fallthru
      _
    %267 = vsyncpa [#allocation3], 1
    %268 = vsyncpa [#allocation6], 1
    %269 = vsyncpa [#allocation4], 1

</llo_original>
